<compile_context>
chip_gen: v7x
topology: tpu7x:2x2x1
jax: 0.10.0
libtpu: 0.0.40
codegen_flags: <defaults>
</compile_context>

<pallas_src>
import functools
import numpy as np
import jax
import jax.numpy as jnp
from jax.experimental import pallas as pl
from jax.experimental.pallas import tpu as pltpu


# --------------------------------------------------------------------------- #
# Kernel
# --------------------------------------------------------------------------- #
def _modconv_kernel(mod_ref, scale_ref, w_ref, x_ref, out_ref, *,
                    kw, pad, w_img, fuse_taps, compute_dtype):
    # ---- modulate activations by per-input-channel style (weight_scale folded)
    x = x_ref[0].astype(jnp.float32) * mod_ref[0].astype(jnp.float32)   # [C_in, thw]
    x = x.astype(compute_dtype)
    thw = x.shape[1]
    col = jax.lax.broadcasted_iota(jnp.int32, (1, thw), 1) % w_img

    def tap(t):
        # shifted[:, p] == x[:, p + d] (tap offset d), zero outside the row.
        d = t - pad
        if d == 0:
            return x
        shifted = pltpu.roll(x, shift=(-d) % thw, axis=1)                # XLU
        valid = (col < w_img - d) if d > 0 else (col >= -d)
        return jnp.where(valid, shifted, jnp.zeros((), x.dtype))

    # ---- convolution as MXU matmul(s), f32 accumulation -----------------------
    if fuse_taps:
        # C_in is sublane-pack aligned: one im2col matmul per tile.
        patch = jnp.concatenate([tap(t) for t in range(kw)], axis=0)     # [kw*C_in, thw]
        acc = jnp.dot(w_ref[...].astype(compute_dtype), patch,
                      preferred_element_type=jnp.float32)                # [C_out, thw]
    else:
        # Small / misaligned C_in: kw accumulating dots, no relayout concat.
        acc = jnp.dot(w_ref[0].astype(compute_dtype), tap(0),
                      preferred_element_type=jnp.float32)
        for t in range(1, kw):
            acc = acc + jnp.dot(w_ref[t].astype(compute_dtype), tap(t),
                                preferred_element_type=jnp.float32)

    # ---- demodulation (or identity) scale, computed once in the wrapper -------
    out_ref[0] = (acc * scale_ref[0].astype(jnp.float32)).astype(out_ref.dtype)


# --------------------------------------------------------------------------- #
# Tiling helpers
# --------------------------------------------------------------------------- #
def _vmem_capacity_bytes(default=128 * 1024 * 1024):
    try:
        info = pltpu.get_tpu_info()
        return int(getattr(info, "vmem_capacity_bytes", default))
    except Exception:
        return default


def _pick_tile_h(H, W, est_bytes, budget_bytes, min_tiles=1):
    """Rows per grid step: largest legal tile fitting the VMEM budget.

    Legal: divisor of H with (th*W) % 128 == 0, or th == H (full-array block).
    Prefers 256-lane alignment (v6e/v7x MXU). Never silently ignores the budget:
    if nothing fits, returns the smallest legal tile (caller raises vmem limit).
    """
    legal = [th for th in range(1, H + 1)
             if H % th == 0 and ((th * W) % 128 == 0 or th == H)]
    constrained = [th for th in legal if H // th >= min_tiles]
    if constrained:
        legal = constrained
    fitting = [th for th in legal if est_bytes(th) <= budget_bytes]
    if not fitting:
        return min(legal)
    best = max(fitting)
    aligned = [th for th in fitting if (th * W) % 256 == 0]
    if aligned and max(aligned) * 2 >= best:
        return max(aligned)
    return best


# --------------------------------------------------------------------------- #
# Wrapper
# --------------------------------------------------------------------------- #
def modulate_conv2d(x, style, conv_w, lin_w, lin_b, *, padding_num, stride_width,
                    lr_mul=1.0, demodulate=True, use_bf16_matmul=False):
    """Pallas implementation of ModulateConv2d.forward((x, style))."""
    # TODO(synk): stride_width > 1 not implemented (the module's final .view()
    # only matches the conv output when stride == 1 anyway).
    assert stride_width == 1
    B, C_in, H, W = x.shape
    C_out, C_in_w, kh, kw = conv_w.shape
    assert C_in_w == C_in
    assert kh == 1, "module's final .view() requires H_out == H, i.e. kh == 1"
    assert kw == 2 * padding_num + 1, "module's final .view() requires W_out == W"
    w_dim = style.shape[1]

    weight_scale = 1.0 / np.sqrt(C_in * kh * kw) * lr_mul
    lin_w_scale = 1.0 / np.sqrt(w_dim) * lr_mul

    # --- style -> per-input-channel modulation (EqualizedLinear + bias + 1) ---
    mod = style.astype(jnp.float32) @ (lin_w.astype(jnp.float32).T * lin_w_scale)
    mod = mod + lin_b.astype(jnp.float32)[None, :] * lr_mul + 1.0            # [B, C_in]

    # --- demodulation as a per-(B, C_out) output scale (tiny XLA op) ----------
    if demodulate:
        w_mod = (conv_w[:, :, 0, :].astype(jnp.float32)[None]                # [1,Co,Ci,kw]
                 * mod[:, None, :, None] * weight_scale)                     # [B,Co,Ci,kw]
        out_scale = jax.lax.rsqrt(jnp.sum(w_mod * w_mod, axis=(2, 3)) + 1e-8)  # [B, Co]
    else:
        out_scale = jnp.ones((B, C_out), jnp.float32)

    mod_x = (mod * weight_scale).reshape(B, C_in, 1)     # x-side modulation, ws folded in
    out_scale = out_scale.reshape(B, C_out, 1)

    # --- compute dtype / tap-fusion strategy ----------------------------------
    compute_dtype = (jnp.bfloat16 if (x.dtype == jnp.bfloat16 or use_bf16_matmul)
                     else jnp.float32)
    sub_pack = 16 if compute_dtype == jnp.bfloat16 else 8
    fuse_taps = (C_in % sub_pack == 0)

    K = kw * C_in
    if fuse_taps:
        # [C_out, kw*C_in], K ordered (tap, C_in) to match the patch concat order.
        w_arg = jnp.transpose(conv_w[:, :, 0, :], (0, 2, 1)).reshape(C_out, K)
        w_spec = pl.BlockSpec((C_out, K), lambda b, t: (0, 0))
    else:
        # [kw, C_out, C_in] -> one accumulating matmul per tap in the kernel.
        w_arg = jnp.transpose(conv_w[:, :, 0, :], (2, 0, 1))
        w_spec = pl.BlockSpec((kw, C_out, C_in), lambda b, t: (0, 0, 0))

    # --- generation-aware VMEM budget & tile selection -------------------------
    vmem_cap = _vmem_capacity_bytes()
    small_vmem = vmem_cap <= 64 * 1024 * 1024            # v7x-class per-TC VMEM
    budget = (14 if small_vmem else 24) * 1024 * 1024
    vmem_limit = (36 if small_vmem else 48) * 1024 * 1024

    HW = H * W
    x_bytes = jnp.dtype(x.dtype).itemsize
    c_bytes = jnp.dtype(compute_dtype).itemsize

    def est_bytes(th, n_x_buf=2):
        hw = th * W
        b = n_x_buf * C_in * hw * x_bytes                 # pipelined x blocks
        b += 2 * C_out * hw * x_bytes                     # pipelined out blocks
        b += C_in * hw * (4 + c_bytes)                    # modulated x (f32 + compute cast)
        b += kw * C_in * hw * c_bytes                     # kw tap views / im2col patch
        b += C_out * hw * 4                               # f32 matmul accumulator
        b += 2 * C_out * K * 4                            # resident weight
        return b

    min_tiles = 2 if (small_vmem and B == 1) else 1       # keep both v7x TCs busy
    tile_h = _pick_tile_h(H, W, est_bytes, budget, min_tiles=min_tiles)
    n_th = H // tile_h
    tile_hw = tile_h * W

    # If even the smallest legal tile exceeds the budget, raise the scoped limit.
    vmem_limit = max(vmem_limit,
                     min(int(est_bytes(tile_h) * 1.25), int(vmem_cap * 0.9)))

    # Optional 3-deep input buffering (v5e bandwidth hiding) when budget permits
    # and the grid is long enough for it to matter.
    deep_x = (B * n_th >= 4) and (est_bytes(tile_h, n_x_buf=3) <= budget)
    x_spec_kwargs = {"pipeline_mode": pl.Buffered(3)} if deep_x else {}
    x_spec = pl.BlockSpec((1, C_in, tile_hw), lambda b, t: (b, 0, t), **x_spec_kwargs)

    x_flat = x.reshape(B, C_in, HW)                       # lane-dense, no HBM-side pad

    kernel = functools.partial(
        _modconv_kernel, kw=kw, pad=padding_num, w_img=W,
        fuse_taps=fuse_taps, compute_dtype=compute_dtype)

    cost = pl.CostEstimate(
        flops=2 * B * C_out * kw * C_in * H * W,
        transcendentals=0,
        bytes_accessed=int(B * C_in * HW * x_bytes + B * C_out * HW * x_bytes
                           + C_out * K * 4 + B * (C_in + C_out) * 4))

    out_flat = pl.pallas_call(
        kernel,
        out_shape=jax.ShapeDtypeStruct((B, C_out, HW), x.dtype),
        grid_spec=pltpu.PrefetchScalarGridSpec(
            num_scalar_prefetch=0,
            grid=(B, n_th),
            in_specs=[
                pl.BlockSpec((1, C_in, 1), lambda b, t: (b, 0, 0)),     # x modulation
                pl.BlockSpec((1, C_out, 1), lambda b, t: (b, 0, 0)),    # output demod scale
                w_spec,                                                 # conv weight (resident)
                x_spec,                                                 # activations
            ],
            out_specs=pl.BlockSpec((1, C_out, tile_hw), lambda b, t: (b, 0, t)),
        ),
        compiler_params=pltpu.CompilerParams(
            dimension_semantics=("parallel", "parallel"),
            vmem_limit_bytes=int(vmem_limit)),
        cost_estimate=cost,
    )(mod_x, out_scale, w_arg, x_flat)

    return out_flat.reshape(B, C_out, H, W)


# --------------------------------------------------------------------------- #
# Pure-JAX reference (matches the PyTorch forward)
# --------------------------------------------------------------------------- #
def modulate_conv2d_ref(x, style, conv_w, lin_w, lin_b, *, padding_num, stride_width,
                        lr_mul=1.0, demodulate=True):
    B, C_in, H, W = x.shape
    C_out, _, kh, kw = conv_w.shape
    w_dim = style.shape[1]
    weight_scale = 1.0 / np.sqrt(C_in * kh * kw) * lr_mul
    temp = style @ (lin_w * (1.0 / np.sqrt(w_dim) * lr_mul)).T          # EqualizedLinear
    mod = temp + lin_b[None, :] * lr_mul + 1.0                          # AddBiasChannelWise + 1
    w_mod = conv_w[None] * mod[:, None, :, None, None] * weight_scale   # [B,Co,Ci,kh,kw]
    if demodulate:
        denom = jax.lax.rsqrt(jnp.sum(w_mod ** 2, axis=(2, 3, 4)) + 1e-8)
        w_mod = w_mod * denom[:, :, None, None, None]
    xpad = jnp.pad(x, ((0, 0), (0, 0), (0, 0), (padding_num, padding_num)))
    H_out = H - kh + 1
    W_out = W + 2 * padding_num - kw + 1
    out = jnp.zeros((B, C_out, H_out, W_out), jnp.float32)
    for i in range(kh):
        for j in range(kw):
            out = out + jnp.einsum('boc,bcyx->boyx', w_mod[:, :, :, i, j],
                                   xpad[:, :, i:i + H_out, j:j + W_out])
    return out.reshape(B, C_out, H, W).astype(x.dtype)


if __name__ == "__main__":
    # small shapes consistent with the module's forward
    B, C_in, C_out = 2, 4, 8
    H = W = 16
    kh, kw = 1, 3
    padding_num, stride_width = 1, 1
    w_dim = 8
    lr_mul = 1.0

    key = jax.random.PRNGKey(0)
    k_x, k_s, k_w, k_lw = jax.random.split(key, 4)
    x = jax.random.normal(k_x, (B, C_in, H, W), jnp.float32)
    style = jax.random.normal(k_s, (B, w_dim), jnp.float32)
    # parameters (deterministic, matching __init__ shapes / init distributions)
    conv_w = jax.random.normal(k_w, (C_out, C_in, kh, kw), jnp.float32) * (1.0 / lr_mul)
    lin_w = jax.random.normal(k_lw, (C_in, w_dim), jnp.float32) * (1.0 / lr_mul)
    lin_b = jnp.zeros((C_in,), jnp.float32)   # AddBiasChannelWise init zeros

    out = modulate_conv2d(x, style, conv_w, lin_w, lin_b,
                          padding_num=padding_num, stride_width=stride_width,
                          lr_mul=lr_mul, demodulate=True)
    out = jax.block_until_ready(out)

    ref = modulate_conv2d_ref(x, style, conv_w, lin_w, lin_b,
                              padding_num=padding_num, stride_width=stride_width,
                              lr_mul=lr_mul, demodulate=True)
    np.testing.assert_allclose(np.asarray(out), np.asarray(ref), rtol=1e-4, atol=1e-4)
    print("KERNEL_OK")
</pallas_src>

<mosaic_0001>
module attributes {stable_mosaic.version = 11 : i64} {
  func.func @_modconv_kernel(%arg0: i32, %arg1: i32, %arg2: memref<1x4x1xf32, #tpu.memory_space<vmem>>, %arg3: memref<1x8x1xf32, #tpu.memory_space<vmem>>, %arg4: memref<3x8x4xf32, #tpu.memory_space<vmem>>, %arg5: memref<1x4x256xf32, #tpu.memory_space<vmem>>, %arg6: memref<1x8x256xf32, #tpu.memory_space<vmem>>) attributes {dimension_semantics = [#tpu.dimension_semantics<parallel>, #tpu.dimension_semantics<parallel>], iteration_bounds = array<i64: 2, 1>, scalar_prefetch = 0 : i64, scratch_operands = 0 : i64, tpu.core_type = #tpu.core_type<tc>, window_params = [{transform_indices = @transform_0, window_bounds = array<i64: 1, 4, 1>}, {transform_indices = @transform_1, window_bounds = array<i64: 1, 8, 1>}, {pipeline_mode = #tpu.pipeline_mode<synchronous>, transform_indices = @transform_2, window_bounds = array<i64: 3, 8, 4>}, {transform_indices = @transform_3, window_bounds = array<i64: 1, 4, 256>}, {transform_indices = @transform_4, window_bounds = array<i64: 1, 8, 256>}]} {
    %c0 = arith.constant 0 : index
    %c0_0 = arith.constant 0 : index
    %c0_1 = arith.constant 0 : index
    %0 = vector.load %arg5[%c0, %c0_0, %c0_1] : memref<1x4x256xf32, #tpu.memory_space<vmem>>, vector<1x4x256xf32>
    %1 = vector.shape_cast %0 : vector<1x4x256xf32> to vector<4x256xf32>
    %c0_2 = arith.constant 0 : index
    %c0_3 = arith.constant 0 : index
    %c0_4 = arith.constant 0 : index
    %2 = vector.load %arg2[%c0_2, %c0_3, %c0_4] : memref<1x4x1xf32, #tpu.memory_space<vmem>>, vector<1x4x1xf32>
    %3 = vector.shape_cast %2 : vector<1x4x1xf32> to vector<4x1xf32>
    %4 = vector.broadcast %3 : vector<4x1xf32> to vector<4x256xf32>
    %5 = arith.mulf %1, %4 : vector<4x256xf32>
    %6 = tpu.iota {dimensions = array<i32: 1>} : vector<1x256xi32>
    %c16_i32 = arith.constant 16 : i32
    %c0_i32 = arith.constant 0 : i32
    %7 = arith.cmpi eq, %c16_i32, %c0_i32 : i32
    %c1_i32 = arith.constant 1 : i32
    %8 = arith.select %7, %c1_i32, %c16_i32 : i32
    %9 = vector.broadcast %8 : i32 to vector<1x256xi32>
    %10 = arith.remsi %6, %9 : vector<1x256xi32>
    %c0_i32_5 = arith.constant 0 : i32
    %11 = vector.broadcast %c0_i32_5 : i32 to vector<1x256xi32>
    %12 = arith.cmpi ne, %10, %11 : vector<1x256xi32>
    %c0_i32_6 = arith.constant 0 : i32
    %13 = vector.broadcast %c0_i32_6 : i32 to vector<1x256xi32>
    %14 = arith.cmpi slt, %10, %13 : vector<1x256xi32>
    %c0_i32_7 = arith.constant 0 : i32
    %15 = arith.cmpi slt, %8, %c0_i32_7 : i32
    %16 = vector.broadcast %15 : i1 to vector<1x256xi1>
    %17 = vector.broadcast %16 : vector<1x256xi1> to vector<1x256xi1>
    %18 = arith.xori %14, %17 : vector<1x256xi1>
    %19 = arith.andi %18, %12 : vector<1x256xi1>
    %20 = vector.broadcast %8 : i32 to vector<1x256xi32>
    %21 = arith.addi %10, %20 : vector<1x256xi32>
    %22 = arith.select %19, %21, %10 : vector<1x256xi1>, vector<1x256xi32>
    %c0_8 = arith.constant 0 : index
    %c0_9 = arith.constant 0 : index
    %c0_10 = arith.constant 0 : index
    %23 = vector.load %arg4[%c0_8, %c0_9, %c0_10] : memref<3x8x4xf32, #tpu.memory_space<vmem>>, vector<1x8x4xf32>
    %24 = vector.shape_cast %23 : vector<1x8x4xf32> to vector<8x4xf32>
    %c1_i32_11 = arith.constant 1 : i32
    %25 = tpu.dynamic_rotate %5 by %c1_i32_11 dim 1 : vector<4x256xf32>, i32 -> vector<4x256xf32>
    %c1_i32_12 = arith.constant 1 : i32
    %26 = vector.broadcast %c1_i32_12 : i32 to vector<1x256xi32>
    %27 = arith.cmpi sge, %22, %26 : vector<1x256xi32>
    %cst = arith.constant 0.000000e+00 : f32
    %28 = vector.shape_cast %27 : vector<1x256xi1> to vector<1x256xi1>
    %29 = vector.broadcast %28 : vector<1x256xi1> to vector<4x256xi1>
    %30 = vector.broadcast %cst : f32 to vector<4x256xf32>
    %31 = arith.select %29, %25, %30 : vector<4x256xi1>, vector<4x256xf32>
    %cst_13 = arith.constant dense<0.000000e+00> : vector<8x256xf32>
    %32 = tpu.matmul %24, %31, %cst_13 {dimension_numbers = #tpu.dot_dimension_numbers<[1], [0], [0], [1], [0, 0, 1, 1], [], []>} : vector<8x4xf32>, vector<4x256xf32>, vector<8x256xf32> -> vector<8x256xf32>
    %c1 = arith.constant 1 : index
    %c0_14 = arith.constant 0 : index
    %c0_15 = arith.constant 0 : index
    %33 = vector.load %arg4[%c1, %c0_14, %c0_15] : memref<3x8x4xf32, #tpu.memory_space<vmem>>, vector<1x8x4xf32>
    %34 = vector.shape_cast %33 : vector<1x8x4xf32> to vector<8x4xf32>
    %cst_16 = arith.constant dense<0.000000e+00> : vector<8x256xf32>
    %35 = tpu.matmul %34, %5, %cst_16 {dimension_numbers = #tpu.dot_dimension_numbers<[1], [0], [0], [1], [0, 0, 1, 1], [], []>} : vector<8x4xf32>, vector<4x256xf32>, vector<8x256xf32> -> vector<8x256xf32>
    %36 = arith.addf %32, %35 : vector<8x256xf32>
    %c2 = arith.constant 2 : index
    %c0_17 = arith.constant 0 : index
    %c0_18 = arith.constant 0 : index
    %37 = vector.load %arg4[%c2, %c0_17, %c0_18] : memref<3x8x4xf32, #tpu.memory_space<vmem>>, vector<1x8x4xf32>
    %38 = vector.shape_cast %37 : vector<1x8x4xf32> to vector<8x4xf32>
    %c255_i32 = arith.constant 255 : i32
    %39 = tpu.dynamic_rotate %5 by %c255_i32 dim 1 : vector<4x256xf32>, i32 -> vector<4x256xf32>
    %c15_i32 = arith.constant 15 : i32
    %40 = vector.broadcast %c15_i32 : i32 to vector<1x256xi32>
    %41 = arith.cmpi slt, %22, %40 : vector<1x256xi32>
    %cst_19 = arith.constant 0.000000e+00 : f32
    %42 = vector.shape_cast %41 : vector<1x256xi1> to vector<1x256xi1>
    %43 = vector.broadcast %42 : vector<1x256xi1> to vector<4x256xi1>
    %44 = vector.broadcast %cst_19 : f32 to vector<4x256xf32>
    %45 = arith.select %43, %39, %44 : vector<4x256xi1>, vector<4x256xf32>
    %cst_20 = arith.constant dense<0.000000e+00> : vector<8x256xf32>
    %46 = tpu.matmul %38, %45, %cst_20 {dimension_numbers = #tpu.dot_dimension_numbers<[1], [0], [0], [1], [0, 0, 1, 1], [], []>} : vector<8x4xf32>, vector<4x256xf32>, vector<8x256xf32> -> vector<8x256xf32>
    %47 = arith.addf %36, %46 : vector<8x256xf32>
    %c0_21 = arith.constant 0 : index
    %c0_22 = arith.constant 0 : index
    %c0_23 = arith.constant 0 : index
    %48 = vector.load %arg3[%c0_21, %c0_22, %c0_23] : memref<1x8x1xf32, #tpu.memory_space<vmem>>, vector<1x8x1xf32>
    %49 = vector.shape_cast %48 : vector<1x8x1xf32> to vector<8x1xf32>
    %50 = vector.broadcast %49 : vector<8x1xf32> to vector<8x256xf32>
    %51 = arith.mulf %47, %50 : vector<8x256xf32>
    %c0_24 = arith.constant 0 : index
    %c0_25 = arith.constant 0 : index
    %c0_26 = arith.constant 0 : index
    %52 = vector.load %arg6[%c0_24, %c0_25, %c0_26] : memref<1x8x256xf32, #tpu.memory_space<vmem>>, vector<1x8x256xf32>
    %53 = vector.shape_cast %52 : vector<1x8x256xf32> to vector<8x256xf32>
    %54 = vector.shape_cast %51 : vector<8x256xf32> to vector<1x8x256xf32>
    tpu.vector_store %arg6[%c0_24, %c0_25, %c0_26], %54 {strides = array<i32>} : memref<1x8x256xf32, #tpu.memory_space<vmem>>, vector<1x8x256xf32>,
    return
  }
  func.func @transform_0(%arg0: i32, %arg1: i32) -> (i32, i32, i32) {
    %c0_i32 = arith.constant 0 : i32
    %c0_i32_0 = arith.constant 0 : i32
    %c0_i32_1 = arith.constant 0 : i32
    return %arg0, %c0_i32, %c0_i32_0 : i32, i32, i32
  }
  func.func @transform_1(%arg0: i32, %arg1: i32) -> (i32, i32, i32) {
    %c0_i32 = arith.constant 0 : i32
    %c0_i32_0 = arith.constant 0 : i32
    %c0_i32_1 = arith.constant 0 : i32
    return %arg0, %c0_i32, %c0_i32_0 : i32, i32, i32
  }
  func.func @transform_2(%arg0: i32, %arg1: i32) -> (i32, i32, i32) {
    %c0_i32 = arith.constant 0 : i32
    %c0_i32_0 = arith.constant 0 : i32
    %c0_i32_1 = arith.constant 0 : i32
    %c0_i32_2 = arith.constant 0 : i32
    return %c0_i32, %c0_i32_0, %c0_i32_1 : i32, i32, i32
  }
  func.func @transform_3(%arg0: i32, %arg1: i32) -> (i32, i32, i32) {
    %c0_i32 = arith.constant 0 : i32
    %c0_i32_0 = arith.constant 0 : i32
    return %arg0, %c0_i32, %arg1 : i32, i32, i32
  }
  func.func @transform_4(%arg0: i32, %arg1: i32) -> (i32, i32, i32) {
    %c0_i32 = arith.constant 0 : i32
    %c0_i32_0 = arith.constant 0 : i32
    return %arg0, %c0_i32, %arg1 : i32, i32, i32
  }
}

</mosaic_0001>

<llo_original>
// kernel: tpu_custom_call.1
$region0: #{tpu_custom_call.1}
  #allocation0 [shape = 'u32[]', space=smem, size = 0x4, offset = 0x4, fixed_abs, tag = 'smem constant byte address 0x4 - core index']
  #allocation1 [shape = 'u32[144,128]{1,0:T(1,128)}', space=vmem, size = 0x12000, scoped, tag = 'internal scratch']
  %s0 = inlined_call_operand.vmem [shape: f32[2,4,1], index: 0, kind: input, shape index: {}]
  %s1 = inlined_call_operand.vmem [shape: f32[2,8,1], index: 1, kind: input, shape index: {}]
  %s2 = inlined_call_operand.vmem [shape: f32[3,8,4], index: 2, kind: input, shape index: {}]
  %s3 = inlined_call_operand.vmem [shape: f32[2,4,256], index: 3, kind: input, shape index: {}]
  %s4 = inlined_call_operand.hbm [shape: f32[2,8,256], index: 4, kind: output, shape index: {}]
  %s5 = sld [smem:[#allocation0]]
  $region49: #{tpu_custom_call.1} parent=0
    _
  %s7 = ssub.s32 1, %s5
  %s8 = scalar_select 0, %s7, %s5
  $region1: #{tpu_custom_call.1} parent=0
    #allocation2 [shape = 'u8[16384]{0}', space=vmem, size = 0x4000, scoped, tag = 'output window, operand 0']
    #allocation3 [shape = 's32[2]{0}', space=sflag, size = 0x8, scoped, tag = 'scoped memory for tpu_custom_call.1']
    %9 = vsyncpa [#allocation3], 0
    %s10 = scalar_lea.sflag [#allocation3], 1
    %11 = vsyncpa %s10, 0
    loop: start=0, step=1, limit=4
    $region2: #{tpu_custom_call.1} parent=1 // loop_pre_header
      _
    $region3: #{tpu_custom_call.1} parent=1 // loop_header
      %s13 = sphi 0, %s17
      %p14 = scmp.ge.s32.totalorder %s13, 4
      %s20 = sphi 0, %s32
      %s21 = sphi 0, %s28
      %s22 = sphi 0, %s20
      %s23 = sphi 0, %s21
      %s24 = sphi 0, %s22
      %s25 = sphi 0, %s23
      %s35 = sphi 0, %s37
      %s38 = sphi 0, %s35
      %s39 = sphi 0, %s38
      %s55 = sphi 0, %s39
      %s61 = sphi 0, %s63
      %s64 = sphi 0, %s61
      %s65 = sphi 0, %s64
      %s81 = sphi 0, %s65
      %s85 = sphi 0, %s85
      %s87 = sphi 0, %s85
      %s88 = sphi 0, %s87
      %s102 = sphi 0, %s88
      %s110 = sphi 0, %s112
      %s113 = sphi 0, %s110
      %s114 = sphi 0, %s113
      %s130 = sphi 0, %s114
      %s138 = sphi 0, %s140
      %s141 = sphi 0, %s138
      %s142 = sphi 0, %s141
      %s158 = sphi 0, %s142
    $region4: #{tpu_custom_call.1} parent=1 // loop_header_branch
      %16 = sbr.rel (%p14) target = $region8
    $region5: #{tpu_custom_call.1} parent=1 // loop_body
      %s18 = ssub.s32 %s13, 1
      %s19 = ssub.s32 %s13, 2
      %s26 = sadd.s32 1, %s21
      %p27 = scmp.ge.s32.totalorder %s26, 1
      %s28 = scalar_select %p27, 0, %s26
      %s29 = sadd.s32 1, %s20
      %s30 = scalar_select %p27, %s29, %s20
      %p31 = scmp.ge.s32.totalorder %s30, 2
      %s32 = scalar_select %p31, 0, %s30
      %s33 = ssub.s32 %s20, %s32
      %p34 = scmp.eq.s32.totalorder %s33, 0
      %s36 = sadd.s32 %s35, 1
      %s37 = scalar_select %p34, %s35, %s36
      %p40 = pneg %p34
      %p41 = scmp.eq.s32.totalorder %s13, 1
      %p42 = por %p40, %p41
      %p43 = scmp.ne.s32.totalorder %s35, %s38
      %p44 = scmp.eq.s32.totalorder %s13, 0
      %p45 = por %p43, %p44
      %p46 = scmp.ne.s32.totalorder %s35, %s38
      %p47 = scmp.eq.s32.totalorder %s18, 1
      %p48 = por %p46, %p47
      %p49 = scmp.ne.s32.totalorder %s38, %s39
      %p50 = scmp.eq.s32.totalorder %s18, 0
      %p51 = por %p49, %p50
      %p52 = scmp.ne.s32.totalorder %s38, %s39
      %p53 = scmp.eq.s32.totalorder %s19, 1
      %p54 = por %p52, %p53
      %p56 = scmp.ne.s32.totalorder %s39, %s55
      %p57 = scmp.eq.s32.totalorder %s19, 0
      %p58 = por %p56, %p57
      %s59 = ssub.s32 %s20, %s32
      %p60 = scmp.eq.s32.totalorder %s59, 0
      %s62 = sadd.s32 %s61, 1
      %s63 = scalar_select %p60, %s61, %s62
      %p66 = pneg %p60
      %p67 = scmp.eq.s32.totalorder %s13, 1
      %p68 = por %p66, %p67
      %p69 = scmp.ne.s32.totalorder %s61, %s64
      %p70 = scmp.eq.s32.totalorder %s13, 0
      %p71 = por %p69, %p70
      %p72 = scmp.ne.s32.totalorder %s61, %s64
      %p73 = scmp.eq.s32.totalorder %s18, 1
      %p74 = por %p72, %p73
      %p75 = scmp.ne.s32.totalorder %s64, %s65
      %p76 = scmp.eq.s32.totalorder %s18, 0
      %p77 = por %p75, %p76
      %p78 = scmp.ne.s32.totalorder %s64, %s65
      %p79 = scmp.eq.s32.totalorder %s19, 1
      %p80 = por %p78, %p79
      %p82 = scmp.ne.s32.totalorder %s65, %s81
      %p83 = scmp.eq.s32.totalorder %s19, 0
      %p84 = por %p82, %p83
      %s86 = sadd.s32 %s85, 1
      %p89 = scmp.eq.s32.totalorder %s13, 1
      %p90 = scmp.ne.s32.totalorder %s85, %s87
      %p91 = scmp.eq.s32.totalorder %s13, 0
      %p92 = por %p90, %p91
      %p93 = scmp.ne.s32.totalorder %s85, %s87
      %p94 = scmp.eq.s32.totalorder %s18, 1
      %p95 = por %p93, %p94
      %p96 = scmp.ne.s32.totalorder %s87, %s88
      %p97 = scmp.eq.s32.totalorder %s18, 0
      %p98 = por %p96, %p97
      %p99 = scmp.ne.s32.totalorder %s87, %s88
      %p100 = scmp.eq.s32.totalorder %s19, 1
      %p101 = por %p99, %p100
      %p103 = scmp.ne.s32.totalorder %s88, %s102
      %p104 = scmp.eq.s32.totalorder %s19, 0
      %p105 = por %p103, %p104
      %s106 = ssub.s32 %s20, %s32
      %s107 = ssub.s32 %s21, %s28
      %s108 = sor.u32 %s106, %s107
      %p109 = scmp.eq.s32.totalorder %s108, 0
      %s111 = sadd.s32 %s110, 1
      %s112 = scalar_select %p109, %s110, %s111
      %p115 = pneg %p109
      %p116 = scmp.eq.s32.totalorder %s13, 1
      %p117 = por %p115, %p116
      %p118 = scmp.ne.s32.totalorder %s110, %s113
      %p119 = scmp.eq.s32.totalorder %s13, 0
      %p120 = por %p118, %p119
      %p121 = scmp.ne.s32.totalorder %s110, %s113
      %p122 = scmp.eq.s32.totalorder %s18, 1
      %p123 = por %p121, %p122
      %p124 = scmp.ne.s32.totalorder %s113, %s114
      %p125 = scmp.eq.s32.totalorder %s18, 0
      %p126 = por %p124, %p125
      %p127 = scmp.ne.s32.totalorder %s113, %s114
      %p128 = scmp.eq.s32.totalorder %s19, 1
      %p129 = por %p127, %p128
      %p131 = scmp.ne.s32.totalorder %s114, %s130
      %p132 = scmp.eq.s32.totalorder %s19, 0
      %p133 = por %p131, %p132
      %s134 = ssub.s32 %s20, %s32
      %s135 = ssub.s32 %s21, %s28
      %s136 = sor.u32 %s134, %s135
      %p137 = scmp.eq.s32.totalorder %s136, 0
      %s139 = sadd.s32 %s138, 1
      %s140 = scalar_select %p137, %s138, %s139
      %p143 = pneg %p137
      %p144 = scmp.eq.s32.totalorder %s13, 1
      %p145 = por %p143, %p144
      %p146 = scmp.ne.s32.totalorder %s138, %s141
      %p147 = scmp.eq.s32.totalorder %s13, 0
      %p148 = por %p146, %p147
      %p149 = scmp.ne.s32.totalorder %s138, %s141
      %p150 = scmp.eq.s32.totalorder %s18, 1
      %p151 = por %p149, %p150
      %p152 = scmp.ne.s32.totalorder %s141, %s142
      %p153 = scmp.eq.s32.totalorder %s18, 0
      %p154 = por %p152, %p153
      %p155 = scmp.ne.s32.totalorder %s141, %s142
      %p156 = scmp.eq.s32.totalorder %s19, 1
      %p157 = por %p155, %p156
      %p159 = scmp.ne.s32.totalorder %s142, %s158
      %p160 = scmp.eq.s32.totalorder %s19, 0
      %p161 = por %p159, %p160
      %p162 = scmp.le.s32.totalorder 1, %s13
      %p163 = scmp.lt.s32.totalorder %s13, 3
      %p164 = pnand %p162, %p163
      %p165 = pneg %p164
      // Predicated region
      $region9: #{tpu_custom_call.1} parent=5 // pred_check
        _
      $region10: #{tpu_custom_call.1} parent=5 // pred_check_branch
        %167 = sbr.rel (%p164) target = $region12
      $region11: #{tpu_custom_call.1} parent=5 // pred_region
        %s168 = ssub.s32 %s13, 1
        // Predicated region
        $region13: #{tpu_custom_call.1} parent=11 // pred_check
          %p169 = pneg %p98
        $region14: #{tpu_custom_call.1} parent=11 // pred_check_branch
          %171 = sbr.rel (%p169) target = $region16
        $region15: #{tpu_custom_call.1} parent=11 // pred_region
          _
        $region16: #{tpu_custom_call.1} parent=11 // pred_fallthru
          _
      $region12: #{tpu_custom_call.1} parent=5 // pred_fallthru
        _
      %p172 = scmp.lt.s32.totalorder %s13, 2
      // Predicated region
      $region17: #{tpu_custom_call.1} parent=5 // pred_check
        %p173 = pneg %p172
      $region18: #{tpu_custom_call.1} parent=5 // pred_check_branch
        %175 = sbr.rel (%p173) target = $region20
      $region19: #{tpu_custom_call.1} parent=5 // pred_region
        // Predicated region
        $region21: #{tpu_custom_call.1} parent=19 // pred_check
          %p176 = pneg %p45
        $region22: #{tpu_custom_call.1} parent=19 // pred_check_branch
          %178 = sbr.rel (%p176) target = $region24
        $region23: #{tpu_custom_call.1} parent=19 // pred_region
          %p179 = scmp.lt.s32.totalorder %s20, 1
          %s180 = scalar_select %p179, %s20, 1
          %s181 = smul.addr %s180, 4
          %s182 = scalar_lea.vmem %s0, %s181
        $region24: #{tpu_custom_call.1} parent=19 // pred_fallthru
          _
        // Predicated region
        $region25: #{tpu_custom_call.1} parent=19 // pred_check
          %p183 = pneg %p71
        $region26: #{tpu_custom_call.1} parent=19 // pred_check_branch
          %185 = sbr.rel (%p183) target = $region28
        $region27: #{tpu_custom_call.1} parent=19 // pred_region
          %p186 = scmp.lt.s32.totalorder %s20, 1
          %s187 = scalar_select %p186, %s20, 1
          %s188 = smul.addr %s187, 8
          %s189 = scalar_lea.vmem %s1, %s188
        $region28: #{tpu_custom_call.1} parent=19 // pred_fallthru
          _
        // Predicated region
        $region29: #{tpu_custom_call.1} parent=19 // pred_check
          %p190 = pneg %p120
        $region30: #{tpu_custom_call.1} parent=19 // pred_check_branch
          %192 = sbr.rel (%p190) target = $region32
        $region31: #{tpu_custom_call.1} parent=19 // pred_region
          %s193 = smul.u32 2, %s21
          %p194 = scmp.lt.s32.totalorder %s20, 1
          %s195 = scalar_select %p194, %s20, 1
          %p196 = scmp.lt.s32.totalorder %s193, 1
          %s197 = scalar_select %p196, %s193, 1
          %s198 = smul.addr %s195, 2
          %s199 = sadd.s32 %s197, %s198
          %s200 = smul.addr %s199, 4
          %s201 = scalar_lea.vmem %s3, %s200
          %s202 = smul.u32 2, %s21
        $region32: #{tpu_custom_call.1} parent=19 // pred_fallthru
          _
      $region20: #{tpu_custom_call.1} parent=5 // pred_fallthru
        _
      %p203 = scmp.le.s32.totalorder 1, %s13
      %p204 = scmp.lt.s32.totalorder %s13, 3
      %p205 = pnand %p203, %p204
      %p206 = pneg %p205
      // Predicated region
      $region33: #{tpu_custom_call.1} parent=5 // pred_check
        _
      $region34: #{tpu_custom_call.1} parent=5 // pred_check_branch
        %208 = sbr.rel (%p205) target = $region36
      $region35: #{tpu_custom_call.1} parent=5 // pred_region
        %s209 = ssub.s32 %s13, 1
        %p210 = scmp.lt.s32.totalorder %s22, 1
        %s211 = scalar_select %p210, %s22, 1
        %s212 = smul.addr %s211, 4
        %s213 = scalar_lea.vmem %s0, %s212
        %p214 = pneg %p51
        %p215 = pneg %p48
        %p216 = scmp.lt.s32.totalorder %s22, 1
        %s217 = scalar_select %p216, %s22, 1
        %s218 = smul.addr %s217, 8
        %s219 = scalar_lea.vmem %s1, %s218
        %p220 = pneg %p77
        %p221 = pneg %p74
        %p222 = pneg %p98
        %p223 = pneg %p95
        %s224 = smul.u32 2, %s23
        %p225 = scmp.lt.s32.totalorder %s22, 1
        %s226 = scalar_select %p225, %s22, 1
        %p227 = scmp.lt.s32.totalorder %s224, 1
        %s228 = scalar_select %p227, %s224, 1
        %s229 = smul.addr %s226, 2
        %s230 = sadd.s32 %s228, %s229
        %s231 = smul.addr %s230, 4
        %s232 = scalar_lea.vmem %s3, %s231
        %p233 = pneg %p126
        %p234 = pneg %p123
        %p235 = pneg %p154
        %p236 = pneg %p151
        %s237 = sand.u32 %s141, 1
        %s238 = scalar_lea.sflag [#allocation3], %s237
        %s239 = sand.u32 %s141, 1
        %s240 = smul.addr %s239, 16
        %s241 = scalar_lea.vmem [#allocation2], %s240
        %p242 = scmp.lt.s32.totalorder %s22, 1
        %s243 = scalar_select %p242, %s22, 1
        %s244 = smul.addr %s243, 4
        %s245 = scalar_lea.vmem %s0, %s244
        %p246 = scmp.lt.s32.totalorder %s22, 1
        %s247 = scalar_select %p246, %s22, 1
        %s248 = smul.addr %s247, 8
        %s249 = scalar_lea.vmem %s1, %s248
        %s250 = smul.u32 2, %s23
        %p251 = scmp.lt.s32.totalorder %s22, 1
        %s252 = scalar_select %p251, %s22, 1
        %p253 = scmp.lt.s32.totalorder %s250, 1
        %s254 = scalar_select %p253, %s250, 1
        %s255 = smul.addr %s252, 2
        %s256 = sadd.s32 %s254, %s255
        %s257 = smul.addr %s256, 4
        %s258 = scalar_lea.vmem %s3, %s257
        %s259 = smul.u32 2, %s23
        %s260 = smul.u32 2, %s23
        %v261 = vld [vmem:[%s258] sm:$0xff]
        %v262 = vld [vmem:[%s245] sm:$0xf]
        %264 = vset.pattern.permute.xlu0 0
        %265 = vperm.xlu0 %264, %v262
        %v266 = vpop.permute.xlu0 %265
        %v268 = vunpack.c.l.s4 839922192
        %v269 = vunpack.c.0.s8 %v268
        %v270 = vlaneseq
        %v271 = vshrl.u32 %v270, 7
        %v272 = vsub.s32 %v269, %v271
        %v273 = vrot.slane %v266, %v272
        %v275 = vmul.f32 %v261, %v273
        %v276 = vlaneseq
        %v277 = vand.u32 %v276, 127
        %v278 = vadd.s32 %v277, 128
        %vm279 = vcmp.lt.s32.totalorder %v277, 0
        %v280 = vsub.s32 0, %v277
        %v281 = vsel %vm279, %v280, %v277
        %v282 = vshrl.u32 %v281, 4
        %v283 = vand.u32 %v281, 15
        %v284 = vsub.s32 0, %v283
        %v285 = vsel %vm279, %v284, %v283
        %vm286 = vcmp.lt.s32.totalorder %v278, 0
        %v287 = vsub.s32 0, %v278
        %v288 = vsel %vm286, %v287, %v278
        %v289 = vshrl.u32 %v288, 4
        %v290 = vand.u32 %v288, 15
        %v291 = vsub.s32 0, %v290
        %v292 = vsel %vm286, %v291, %v290
        %vm293 = vcmp.ne.s32.totalorder %v285, 0
        %vm294 = vcmp.ne.s32.totalorder %v292, 0
        %vm295 = vcmp.lt.s32.totalorder %v285, 0
        %vm296 = vcmp.lt.s32.totalorder %v292, 0
        %vm297 = vmand %vm295, %vm293
        %vm298 = vmand %vm296, %vm294
        %v299 = vadd.s32 %v285, 16
        %v300 = vadd.s32 %v292, 16
        %v301 = vsel %vm297, %v299, %v285
        %v302 = vsel %vm298, %v300, %v292
        %v303 = vld [vmem:[%s2] sm:$0xff]
        %v305 = vcombine.high %v275, %v275
        %307 = vrot.lane.b32.xlu0 %v275, 1
        %v308 = vpop.permute.xlu0 %307
        %309 = vrot.lane.b32.xlu0 %v305, 1
        %v310 = vpop.permute.xlu0 %309
        %vm311 = vcmp.lt.s32.totalorder %v277, 1
        %v312 = vsel %vm311, %v308, %v310
        %v313 = vsel %vm311, %v310, %v308
        %vm314 = vcmp.ge.s32.totalorder %v301, 1
        %vm315 = vcmp.ge.s32.totalorder %v302, 1
        %v316 = vsel %vm314, 1, 0
        %v317 = vsel %vm315, 1, 0
        %vm318 = vcmp.eq.s32.totalorder %v316, 1
        %vm319 = vcmp.eq.s32.totalorder %v317, 1
        %v320 = vsel %vm318, %v313, 0.0
        %v321 = vsel %vm319, %v312, 0.0
        %s322 = scalar_lea.vmem %s2, 8
        %v323 = vld [vmem:[%s322] sm:$0xff]
        %vm324 = vcmask 31744
        %v326 = vsel %vm324, %v323, 0
        %vm328 = vcmask 1043456
        %v329 = vsel %vm328, %v275, 0
        %v331 = vsel %vm328, %v305, 0
        %333 = vmatprep.subr.mxu0 %v331
        %334 = vmatpush1.msra.mxu0 %v329
        %335 = vmatprep.subr.mxu0 0.0
        %336 = vmatpush1.msra.mxu0 0.0
        %337 = vmatprep.subr.mxu0 0.0
        %338 = vmatpush1.msra.mxu0 0.0
        %339 = vmatprep.subr.mxu0 0.0
        %340 = vmatpush1.msra.mxu0 0.0
        %341 = vmatprep.subr.mxu0 0.0
        %342 = vmatpush1.msra.mxu0 0.0
        %343 = vmatprep.subr.mxu0 0.0
        %344 = vmatpush1.msra.mxu0 0.0
        %345 = vmatprep.subr.mxu0 0.0
        %346 = vmatpush1.msra.mxu0 0.0
        %347 = vmatprep.subr.mxu0 0.0
        %348 = vmatpush1.msra.mxu0 0.0
        %349 = vmatprep.subr.mxu0 0.0
        %350 = vmatpush1.msra.mxu0 0.0
        %351 = vmatprep.subr.mxu0 0.0
        %352 = vmatpush1.msra.mxu0 0.0
        %353 = vmatprep.subr.mxu0 0.0
        %354 = vmatpush1.msra.mxu0 0.0
        %355 = vmatprep.subr.mxu0 0.0
        %356 = vmatpush1.msra.mxu0 0.0
        %357 = vmatprep.subr.mxu0 0.0
        %358 = vmatpush1.msra.mxu0 0.0
        %359 = vmatprep.subr.mxu0 0.0
        %360 = vmatpush1.msra.mxu0 0.0
        %361 = vmatprep.subr.mxu0 0.0
        %362 = vmatpush1.msra.mxu0 0.0
        %363 = vmatprep.subr.mxu0 0.0
        %364 = vmatpush1.msra.mxu0 0.0
        %365 = vmatprep.subr.mxu0 0.0
        %366 = vmatpush1.msra.mxu0 0.0
        %367 = vmatprep.subr.mxu0 0.0
        %368 = vmatpush1.msra.mxu0 0.0
        %369 = vmatprep.subr.mxu0 0.0
        %370 = vmatpush1.msra.mxu0 0.0
        %371 = vmatprep.subr.mxu0 0.0
        %372 = vmatpush1.msra.mxu0 0.0
        %373 = vmatprep.subr.mxu0 0.0
        %374 = vmatpush1.msra.mxu0 0.0
        %375 = vmatprep.subr.mxu0 0.0
        %376 = vmatpush1.msra.mxu0 0.0
        %377 = vmatprep.subr.mxu0 0.0
        %378 = vmatpush1.msra.mxu0 0.0
        %379 = vmatprep.subr.mxu0 0.0
        %380 = vmatpush1.msra.mxu0 0.0
        %381 = vmatprep.subr.mxu0 0.0
        %382 = vmatpush1.msra.mxu0 0.0
        %383 = vmatprep.subr.mxu0 0.0
        %384 = vmatpush1.msra.mxu0 0.0
        %385 = vmatprep.subr.mxu0 0.0
        %386 = vmatpush1.msra.mxu0 0.0
        %387 = vmatprep.subr.mxu0 0.0
        %388 = vmatpush1.msra.mxu0 0.0
        %389 = vmatprep.subr.mxu0 0.0
        %390 = vmatpush1.msra.mxu0 0.0
        %391 = vmatprep.subr.mxu0 0.0
        %392 = vmatpush1.msra.mxu0 0.0
        %393 = vmatprep.subr.mxu0 0.0
        %394 = vmatpush1.msra.mxu0 0.0
        %395 = vmatprep.subr.mxu0 0.0
        %396 = vmatpush1.msra.mxu0 0.0
        %397 = vmatprep.mubr.f32.mxu0 0.0
        %398 = vmatmul.mubr.f32.gmra.mrb[0].mxu0 %v326
        %v399 = vpop.f32.mrb[0].mxu0
        %v400 = vadd.f32 0.0, %v399
        %v401 = vpop.f32.mrb[0].mxu0
        %v402 = vadd.f32 0.0, %v401
        %403 = vdwg.mxu0
        %v405 = vsel %vm324, %v303, 0
        %v408 = vsel %vm328, %v320, 0
        %v411 = vsel %vm328, %v321, 0
        %413 = vmatprep.subr.mxu0 %v411
        %414 = vmatpush1.msra.mxu0 %v408
        %415 = vmatprep.subr.mxu0 0.0
        %416 = vmatpush1.msra.mxu0 0.0
        %417 = vmatprep.subr.mxu0 0.0
        %418 = vmatpush1.msra.mxu0 0.0
        %419 = vmatprep.subr.mxu0 0.0
        %420 = vmatpush1.msra.mxu0 0.0
        %421 = vmatprep.subr.mxu0 0.0
        %422 = vmatpush1.msra.mxu0 0.0
        %423 = vmatprep.subr.mxu0 0.0
        %424 = vmatpush1.msra.mxu0 0.0
        %425 = vmatprep.subr.mxu0 0.0
        %426 = vmatpush1.msra.mxu0 0.0
        %427 = vmatprep.subr.mxu0 0.0
        %428 = vmatpush1.msra.mxu0 0.0
        %429 = vmatprep.subr.mxu0 0.0
        %430 = vmatpush1.msra.mxu0 0.0
        %431 = vmatprep.subr.mxu0 0.0
        %432 = vmatpush1.msra.mxu0 0.0
        %433 = vmatprep.subr.mxu0 0.0
        %434 = vmatpush1.msra.mxu0 0.0
        %435 = vmatprep.subr.mxu0 0.0
        %436 = vmatpush1.msra.mxu0 0.0
        %437 = vmatprep.subr.mxu0 0.0
        %438 = vmatpush1.msra.mxu0 0.0
        %439 = vmatprep.subr.mxu0 0.0
        %440 = vmatpush1.msra.mxu0 0.0
        %441 = vmatprep.subr.mxu0 0.0
        %442 = vmatpush1.msra.mxu0 0.0
        %443 = vmatprep.subr.mxu0 0.0
        %444 = vmatpush1.msra.mxu0 0.0
        %445 = vmatprep.subr.mxu0 0.0
        %446 = vmatpush1.msra.mxu0 0.0
        %447 = vmatprep.subr.mxu0 0.0
        %448 = vmatpush1.msra.mxu0 0.0
        %449 = vmatprep.subr.mxu0 0.0
        %450 = vmatpush1.msra.mxu0 0.0
        %451 = vmatprep.subr.mxu0 0.0
        %452 = vmatpush1.msra.mxu0 0.0
        %453 = vmatprep.subr.mxu0 0.0
        %454 = vmatpush1.msra.mxu0 0.0
        %455 = vmatprep.subr.mxu0 0.0
        %456 = vmatpush1.msra.mxu0 0.0
        %457 = vmatprep.subr.mxu0 0.0
        %458 = vmatpush1.msra.mxu0 0.0
        %459 = vmatprep.subr.mxu0 0.0
        %460 = vmatpush1.msra.mxu0 0.0
        %461 = vmatprep.subr.mxu0 0.0
        %462 = vmatpush1.msra.mxu0 0.0
        %463 = vmatprep.subr.mxu0 0.0
        %464 = vmatpush1.msra.mxu0 0.0
        %465 = vmatprep.subr.mxu0 0.0
        %466 = vmatpush1.msra.mxu0 0.0
        %467 = vmatprep.subr.mxu0 0.0
        %468 = vmatpush1.msra.mxu0 0.0
        %469 = vmatprep.subr.mxu0 0.0
        %470 = vmatpush1.msra.mxu0 0.0
        %471 = vmatprep.subr.mxu0 0.0
        %472 = vmatpush1.msra.mxu0 0.0
        %473 = vmatprep.subr.mxu0 0.0
        %474 = vmatpush1.msra.mxu0 0.0
        %475 = vmatprep.subr.mxu0 0.0
        %476 = vmatpush1.msra.mxu0 0.0
        %477 = vmatprep.mubr.f32.mxu0 0.0
        %478 = vmatmul.mubr.f32.gmra.mrb[0].mxu0 %v405
        %v479 = vpop.f32.mrb[0].mxu0
        %v480 = vadd.f32 %v400, %v479
        %v481 = vpop.f32.mrb[0].mxu0
        %v482 = vadd.f32 %v402, %v481
        %483 = vdwg.mxu0
        %s484 = scalar_lea.vmem %s2, 16
        %v485 = vld [vmem:[%s484] sm:$0xff]
        %486 = vrot.lane.b32.xlu0 %v275, 127
        %v487 = vpop.permute.xlu0 %486
        %488 = vrot.lane.b32.xlu0 %v305, 127
        %v489 = vpop.permute.xlu0 %488
        %vm490 = vcmp.lt.s32.totalorder %v277, 127
        %v491 = vsel %vm490, %v487, %v489
        %v492 = vsel %vm490, %v489, %v487
        %vm493 = vcmp.lt.s32.totalorder %v301, 15
        %vm494 = vcmp.lt.s32.totalorder %v302, 15
        %v495 = vsel %vm493, 1, 0
        %v496 = vsel %vm494, 1, 0
        %vm497 = vcmp.eq.s32.totalorder %v495, 1
        %vm498 = vcmp.eq.s32.totalorder %v496, 1
        %v499 = vsel %vm497, %v491, 0.0
        %v500 = vsel %vm498, %v492, 0.0
        %v502 = vsel %vm324, %v485, 0
        %v505 = vsel %vm328, %v499, 0
        %v508 = vsel %vm328, %v500, 0
        %510 = vmatprep.subr.mxu0 %v508
        %511 = vmatpush1.msra.mxu0 %v505
        %512 = vmatprep.subr.mxu0 0.0
        %513 = vmatpush1.msra.mxu0 0.0
        %514 = vmatprep.subr.mxu0 0.0
        %515 = vmatpush1.msra.mxu0 0.0
        %516 = vmatprep.subr.mxu0 0.0
        %517 = vmatpush1.msra.mxu0 0.0
        %518 = vmatprep.subr.mxu0 0.0
        %519 = vmatpush1.msra.mxu0 0.0
        %520 = vmatprep.subr.mxu0 0.0
        %521 = vmatpush1.msra.mxu0 0.0
        %522 = vmatprep.subr.mxu0 0.0
        %523 = vmatpush1.msra.mxu0 0.0
        %524 = vmatprep.subr.mxu0 0.0
        %525 = vmatpush1.msra.mxu0 0.0
        %526 = vmatprep.subr.mxu0 0.0
        %527 = vmatpush1.msra.mxu0 0.0
        %528 = vmatprep.subr.mxu0 0.0
        %529 = vmatpush1.msra.mxu0 0.0
        %530 = vmatprep.subr.mxu0 0.0
        %531 = vmatpush1.msra.mxu0 0.0
        %532 = vmatprep.subr.mxu0 0.0
        %533 = vmatpush1.msra.mxu0 0.0
        %534 = vmatprep.subr.mxu0 0.0
        %535 = vmatpush1.msra.mxu0 0.0
        %536 = vmatprep.subr.mxu0 0.0
        %537 = vmatpush1.msra.mxu0 0.0
        %538 = vmatprep.subr.mxu0 0.0
        %539 = vmatpush1.msra.mxu0 0.0
        %540 = vmatprep.subr.mxu0 0.0
        %541 = vmatpush1.msra.mxu0 0.0
        %542 = vmatprep.subr.mxu0 0.0
        %543 = vmatpush1.msra.mxu0 0.0
        %544 = vmatprep.subr.mxu0 0.0
        %545 = vmatpush1.msra.mxu0 0.0
        %546 = vmatprep.subr.mxu0 0.0
        %547 = vmatpush1.msra.mxu0 0.0
        %548 = vmatprep.subr.mxu0 0.0
        %549 = vmatpush1.msra.mxu0 0.0
        %550 = vmatprep.subr.mxu0 0.0
        %551 = vmatpush1.msra.mxu0 0.0
        %552 = vmatprep.subr.mxu0 0.0
        %553 = vmatpush1.msra.mxu0 0.0
        %554 = vmatprep.subr.mxu0 0.0
        %555 = vmatpush1.msra.mxu0 0.0
        %556 = vmatprep.subr.mxu0 0.0
        %557 = vmatpush1.msra.mxu0 0.0
        %558 = vmatprep.subr.mxu0 0.0
        %559 = vmatpush1.msra.mxu0 0.0
        %560 = vmatprep.subr.mxu0 0.0
        %561 = vmatpush1.msra.mxu0 0.0
        %562 = vmatprep.subr.mxu0 0.0
        %563 = vmatpush1.msra.mxu0 0.0
        %564 = vmatprep.subr.mxu0 0.0
        %565 = vmatpush1.msra.mxu0 0.0
        %566 = vmatprep.subr.mxu0 0.0
        %567 = vmatpush1.msra.mxu0 0.0
        %568 = vmatprep.subr.mxu0 0.0
        %569 = vmatpush1.msra.mxu0 0.0
        %570 = vmatprep.subr.mxu0 0.0
        %571 = vmatpush1.msra.mxu0 0.0
        %572 = vmatprep.subr.mxu0 0.0
        %573 = vmatpush1.msra.mxu0 0.0
        %574 = vmatprep.mubr.f32.mxu0 0.0
        %575 = vmatmul.mubr.f32.gmra.mrb[0].mxu0 %v502
        %v576 = vpop.f32.mrb[0].mxu0
        %v577 = vadd.f32 0.0, %v576
        %v578 = vpop.f32.mrb[0].mxu0
        %v579 = vadd.f32 0.0, %v578
        %580 = vdwg.mxu0
        %v581 = vadd.f32 %v480, %v577
        %v582 = vadd.f32 %v482, %v579
        %v583 = vld [vmem:[%s249] sm:$0xff]
        %585 = vset.pattern.permute.xlu0 0
        %586 = vperm.xlu0 %585, %v583
        %v587 = vpop.permute.xlu0 %586
        %v589 = vmul.f32 %v581, %v587
        %v590 = vmul.f32 %v582, %v587
        %591 = vst [vmem:[%s241] sm:$0xff] %v589
        %592 = vst [vmem:[%s241 + $0x8] sm:$0xff] %v590
        %s593 = sand.u32 %s141, 1
        %s594 = scalar_lea.sflag [#allocation3], %s593
        %s595 = sand.u32 %s141, 1
        %s596 = smul.addr %s595, 16
        %s597 = scalar_lea.vmem [#allocation2], %s596
        // Predicated region
        $region37: #{tpu_custom_call.1} parent=35 // pred_check
          %p598 = pneg %p151
        $region38: #{tpu_custom_call.1} parent=35 // pred_check_branch
          %600 = sbr.rel (%p598) target = $region40
        $region39: #{tpu_custom_call.1} parent=35 // pred_region
          %s601 = smul.u32 2, %s23
          %s603 = ssub.s32 256, 256
          %604 = vsyncadd %s594, %s603
          %s605 = smul.addr %s22, 2
          %s606 = sadd.s32 %s601, %s605
          %s607 = smul.addr %s606, 128
          %s608 = scalar_lea.hbm %s4, %s607
          %s610 = sshll.u32 %s597, 4
          %s611 = int_to_ptr.vmem [resolvable:$true] %s610
          %613 = dma.vmem_to_hbm [thread:$0]  %s611, 256, %s608, %s594
        $region40: #{tpu_custom_call.1} parent=35 // pred_fallthru
          _
      $region36: #{tpu_custom_call.1} parent=5 // pred_fallthru
        _
      %p614 = scmp.le.s32.totalorder 2, %s13
      // Predicated region
      $region41: #{tpu_custom_call.1} parent=5 // pred_check
        %p615 = pneg %p614
      $region42: #{tpu_custom_call.1} parent=5 // pred_check_branch
        %617 = sbr.rel (%p615) target = $region44
      $region43: #{tpu_custom_call.1} parent=5 // pred_region
        %s618 = ssub.s32 %s13, 2
        // Predicated region
        $region45: #{tpu_custom_call.1} parent=43 // pred_check
          %p619 = pneg %p157
        $region46: #{tpu_custom_call.1} parent=43 // pred_check_branch
          %621 = sbr.rel (%p619) target = $region48
        $region47: #{tpu_custom_call.1} parent=43 // pred_region
          %s622 = sand.u32 %s142, 1
          %s623 = scalar_lea.sflag [#allocation3], %s622
          %s624 = sand.u32 %s142, 1
          %s625 = smul.addr %s624, 16
          %s626 = scalar_lea.vmem [#allocation2], %s625
          %627 = dma.done %s623, 256
        $region48: #{tpu_custom_call.1} parent=43 // pred_fallthru
          _
      $region44: #{tpu_custom_call.1} parent=5 // pred_fallthru
        _
    $region6: #{tpu_custom_call.1} parent=1 // loop_footer
      %s17 = sadd.s32 1, %s13
    $region7: #{tpu_custom_call.1} parent=1 // loop_footer_branch
      %12 = sbr.rel target = $region3
    $region8: #{tpu_custom_call.1} parent=1 // loop_exit
      _
    %628 = vsyncpa [#allocation3], 1
    %s629 = scalar_lea.sflag [#allocation3], 1
    %630 = vsyncpa %s629, 1

</llo_original>
